<compile_context>
chip_gen: v7x
topology: tpu7x:2x2x1
jax: 0.10.0
libtpu: 0.0.40
codegen_flags: <defaults>
</compile_context>

<pallas_src>
import functools
import math
from typing import Optional

import numpy as np

import jax
import jax.numpy as jnp
from jax.experimental import pallas as pl
from jax.experimental.pallas import tpu as pltpu

_LANES = 128
_MIN_GRID_STEPS = 4          # let both v7x TensorCores / DMA queues engage
_MIN_SPLIT_BYTES = 1 << 20   # don't split tiny tensors (pure per-step overhead)


# --------------------------------------------------------------------------- #
# Small helpers
# --------------------------------------------------------------------------- #
def _cdiv(a: int, b: int) -> int:
    return -(-a // b)


def _round_up(x: int, m: int) -> int:
    return ((x + m - 1) // m) * m


def _round_down(x: int, m: int) -> int:
    return (x // m) * m


@functools.lru_cache(maxsize=None)
def _step_target_bytes() -> int:
    """Target streamed HBM bytes (x [+ y] + out) per grid step.

    ~12 MiB keeps each stream well past the measured ~85%-of-roofline knee on
    v5e/v6e while double-buffered VMEM stays ~24-32 MiB. On v7x-class chips
    (~3.2 TB/s per TC, 64 MiB VMEM) a slightly larger step keeps the ~0.35 us
    per-grid-step overhead under ~10%.
    """
    step = 12 << 20
    try:
        if int(pltpu.get_tpu_info().vmem_capacity_bytes) <= (64 << 20):
            step = 16 << 20
    except Exception:
        pass
    return step


def _vmem_limit_bytes(stream_block_bytes: int, small_block_bytes: int) -> int:
    # 2 pipeline buffers per streamed operand + small-operand buffers + headroom.
    need = 2 * stream_block_bytes + 2 * small_block_bytes + (8 << 20)
    return int(min(max(need, 32 << 20), 52 << 20))


def _choose_tiles(R: int, C: int, elem_budget: int, sub: int):
    """Pick (tr, tc) so that the padded block never exceeds elem_budget."""
    elem_budget = max(elem_budget, sub * _LANES)
    if C * sub <= elem_budget:
        tc = C                                    # full lane extent (always legal)
    else:
        tc = max(_LANES, _round_down(elem_budget // sub, _LANES))
        tc = min(tc, _round_down(C, _LANES))      # C > 128 here by construction
    tr_budget = max(sub, _round_down(elem_budget // max(tc, 1), sub))
    tr = R if R <= tr_budget else tr_budget
    return tr, tc


def _ensure_min_steps(R, C, tr, tc, sub, approx_bytes):
    """Split rows so medium tensors produce >= _MIN_GRID_STEPS grid steps
    (lets the 2 TensorCores on v7x share 'parallel' axes)."""
    col_steps = _cdiv(C, tc)
    steps = _cdiv(R, tr) * col_steps
    if steps >= _MIN_GRID_STEPS or approx_bytes < _MIN_SPLIT_BYTES:
        return tr, tc
    rows_wanted = _cdiv(_MIN_GRID_STEPS, col_steps)
    tr_new = _round_up(_cdiv(R, rows_wanted), sub)
    if sub <= tr_new < R:
        tr = tr_new
    return tr, tc


def _factor_2d(shape):
    """Exact (no-pad) 2D (R, C) factorization with a lane-dense C."""
    total = math.prod(shape) if shape else 1
    c = 1
    k = len(shape)
    while k > 0 and c < _LANES:
        c *= shape[k - 1]
        k -= 1
    c = max(c, 1)
    r = max(total // c, 1)
    if r < 8 and total % _LANES == 0:
        return total // _LANES, _LANES
    return r, c


def _collapse(out_shape, small_p):
    """Collapse consecutive out dims into (size, is_broadcast) groups.

    Size-1 output dims are dropped; consecutive dims with the same broadcast
    flag are merged, so the result strictly alternates match/broadcast.
    """
    groups = []
    for o, s in zip(out_shape, small_p):
        if o == 1:
            continue
        b = (s == 1)
        if groups and groups[-1][1] == b:
            groups[-1][0] *= o
        else:
            groups.append([o, b])
    return [(int(g[0]), g[1]) for g in groups]


# --------------------------------------------------------------------------- #
# Kernel
# --------------------------------------------------------------------------- #
def _binop_kernel(x_ref, y_ref, o_ref, *, op, y_is_first, y_in_smem):
    # NOTE: partial edge blocks feed garbage lanes into `op` (e.g. inf/NaN for
    # divide). That is harmless on TPU: there are no FP traps and out-of-range
    # lanes are masked on store. Do not "fix" this with a pad pass.
    x = x_ref[...]
    y = y_ref[0, 0] if y_in_smem else y_ref[...]
    r = op(y, x) if y_is_first else op(x, y)
    o_ref[...] = r.astype(o_ref.dtype)


# --------------------------------------------------------------------------- #
# Launchers
# --------------------------------------------------------------------------- #
def _launch2d(x2, y2, out_dtype, op, y_is_first):
    """Elementwise op over a 2D slab x2 (R, C).

    y2 must be (R, C), (R, 1), (1, C) or (1, 1); it is broadcast in-kernel.
    """
    R, C = map(int, x2.shape)
    yr, yc = map(int, y2.shape)
    x_item = x2.dtype.itemsize
    y_item = y2.dtype.itemsize
    out_item = np.dtype(out_dtype).itemsize
    y_full = (yr, yc) == (R, C)

    per_elem = x_item + out_item + (y_item if y_full else 0)
    elem_budget = max(_step_target_bytes() // per_elem, 8 * _LANES)
    sub = max(8, 32 // max(1, min(x_item, out_item)))
    tr, tc = _choose_tiles(R, C, elem_budget, sub)

    if (yr, yc) == (R, 1) and R > 1024:
        # A (tr,1) VMEM block pads to (tr,128); keep that lane-padding waste bounded.
        tr = min(tr, 1024)

    tr, tc = _ensure_min_steps(R, C, tr, tc, sub, R * C * max(x_item, out_item))
    grid = (_cdiv(R, tr), _cdiv(C, tc))

    y_in_smem = False
    if y_full:
        y_spec = pl.BlockSpec((tr, tc), lambda i, j: (i, j))
        y_block_bytes = 0  # counted in the streamed-block bytes below
    elif (yr, yc) == (R, 1):
        y_spec = pl.BlockSpec((tr, 1), lambda i, j: (i, 0))
        y_block_bytes = _round_up(tr, sub) * _LANES * y_item
    elif (yr, yc) == (1, C):
        y_spec = pl.BlockSpec((1, tc), lambda i, j: (0, j))
        y_block_bytes = 8 * _round_up(tc, _LANES) * y_item
    elif (yr, yc) == (1, 1):
        if str(y2.dtype) in ("float32", "int32", "uint32"):
            # Scalar operand rides in SMEM: no VMEM tile, no per-step DMA.
            y_in_smem = True
            y_spec = pl.BlockSpec(memory_space=pltpu.MemorySpace.SMEM)
            y_block_bytes = 0
        else:
            y_spec = pl.BlockSpec((1, 1), lambda i, j: (0, 0))
            y_block_bytes = 8 * _LANES * y_item
    else:
        raise ValueError(f"unsupported small-operand slab {(yr, yc)} vs {(R, C)}")

    stream_block_bytes = (_round_up(tr, sub) * _round_up(tc, _LANES)
                          * (x_item + out_item + (y_item if y_full else 0)))
    vmem_limit = _vmem_limit_bytes(stream_block_bytes, y_block_bytes)

    cost = pl.CostEstimate(
        flops=R * C, transcendentals=0,
        bytes_accessed=int(x2.size) * x_item + int(y2.size) * y_item
        + R * C * out_item)

    return pl.pallas_call(
        functools.partial(_binop_kernel, op=op, y_is_first=y_is_first,
                          y_in_smem=y_in_smem),
        out_shape=jax.ShapeDtypeStruct((R, C), out_dtype),
        grid_spec=pltpu.PrefetchScalarGridSpec(
            num_scalar_prefetch=0,
            grid=grid,
            in_specs=[pl.BlockSpec((tr, tc), lambda i, j: (i, j)), y_spec],
            out_specs=pl.BlockSpec((tr, tc), lambda i, j: (i, j)),
        ),
        compiler_params=pltpu.CompilerParams(
            dimension_semantics=("parallel", "parallel"),
            vmem_limit_bytes=vmem_limit,
        ),
        cost_estimate=cost,
    )(x2, y2)


def _launch3d(x3, y3, out_dtype, op, y_is_first):
    """Middle-dim broadcast: x3 is (A, B, C), y3 is (A, 1, C)."""
    A, B, C = map(int, x3.shape)
    x_item = x3.dtype.itemsize
    y_item = y3.dtype.itemsize
    out_item = np.dtype(out_dtype).itemsize

    per_elem = x_item + out_item
    elem_budget = max(_step_target_bytes() // per_elem, 8 * _LANES)
    sub = max(8, 32 // max(1, min(x_item, out_item)))
    tb, tc = _choose_tiles(B, C, elem_budget, sub)
    grid = (A, _cdiv(B, tb), _cdiv(C, tc))

    stream_block_bytes = (_round_up(tb, sub) * _round_up(tc, _LANES)
                          * (x_item + out_item))
    y_block_bytes = 8 * _round_up(tc, _LANES) * y_item
    vmem_limit = _vmem_limit_bytes(stream_block_bytes, y_block_bytes)

    cost = pl.CostEstimate(
        flops=A * B * C, transcendentals=0,
        bytes_accessed=int(x3.size) * x_item + int(y3.size) * y_item
        + A * B * C * out_item)

    return pl.pallas_call(
        functools.partial(_binop_kernel, op=op, y_is_first=y_is_first,
                          y_in_smem=False),
        out_shape=jax.ShapeDtypeStruct((A, B, C), out_dtype),
        grid_spec=pltpu.PrefetchScalarGridSpec(
            num_scalar_prefetch=0,
            grid=grid,
            in_specs=[pl.BlockSpec((1, tb, tc), lambda a, b, c: (a, b, c)),
                      pl.BlockSpec((1, 1, tc), lambda a, b, c: (a, 0, c))],
            out_specs=pl.BlockSpec((1, tb, tc), lambda a, b, c: (a, b, c)),
        ),
        compiler_params=pltpu.CompilerParams(
            dimension_semantics=("parallel", "parallel", "parallel"),
            vmem_limit_bytes=vmem_limit,
        ),
        cost_estimate=cost,
    )(x3, y3)


# --------------------------------------------------------------------------- #
# Dispatch
# --------------------------------------------------------------------------- #
def old_style_broadcast(first: jax.Array, second: jax.Array, axis: int) -> jax.Array:
    """ONNX opset<7 broadcast: align `second` dims with `first` at `axis`."""
    rank = first.ndim
    axis = axis + rank if axis < 0 else axis
    shape = [1] * axis + list(second.shape)
    shape = shape + [1] * (rank - len(shape))
    return jnp.reshape(second, shape)


def _binary_op_pallas(first, second, op):
    a = jnp.asarray(first)
    b = jnp.asarray(second)
    out_shape = tuple(jnp.broadcast_shapes(a.shape, b.shape))
    # Result dtype comes from the op itself (e.g. int / int true_divide -> f32).
    out_dtype = jax.eval_shape(op,
                               jax.ShapeDtypeStruct((), a.dtype),
                               jax.ShapeDtypeStruct((), b.dtype)).dtype

    rank = len(out_shape)
    total = math.prod(out_shape) if out_shape else 1
    if total == 0:
        return jnp.zeros(out_shape, out_dtype)

    a_p = (1,) * (rank - a.ndim) + tuple(a.shape)
    b_p = (1,) * (rank - b.ndim) + tuple(b.shape)
    a_full = a_p == out_shape
    b_full = b_p == out_shape

    if a_full != b_full:
        if a_full:
            full, small, small_p, y_is_first = a, b, b_p, False
        else:
            full, small, small_p, y_is_first = b, a, a_p, True

        groups = _collapse(out_shape, small_p)
        sizes = [s for s, _ in groups]
        pat = [bc for _, bc in groups]
        small_c = small.reshape(tuple(1 if bc else s for s, bc in groups))

        if all(pat):
            # Scalar-like operand: stream only the big tensor; the scalar rides
            # along in SMEM (or a constant (1,1) VMEM block).
            x2 = full.reshape(_factor_2d(out_shape))
            out2 = _launch2d(x2, small_c.reshape(1, 1), out_dtype, op, y_is_first)
            return out2.reshape(out_shape)

        inner = sizes[-1]
        if pat[-1] and inner >= _LANES:
            # Trailing broadcast ("per-channel"): stream full as (outer, inner),
            # small as an (outer, 1) column (materializes only total/inner elems).
            outer = total // inner
            x2 = full.reshape(outer, inner)
            y2 = jnp.broadcast_to(small_c[..., 0], tuple(sizes[:-1])).reshape(outer, 1)
            out2 = _launch2d(x2, y2, out_dtype, op, y_is_first)
            return out2.reshape(out_shape)

        if (not pat[-1]) and inner >= _LANES:
            if all(pat[:-1]):
                # Trailing "bias": small matches the trailing dims exactly.
                outer = total // inner
                x2 = full.reshape(outer, inner)
                y2 = small_c.reshape(1, inner)
                out2 = _launch2d(x2, y2, out_dtype, op, y_is_first)
                return out2.reshape(out_shape)
            if pat == [False, True, False]:
                # Middle-dim broadcast, e.g. (B,1,D) vs (B,S,D): 3D launch whose
                # y index_map ignores the broadcast grid axis — no HBM blow-up.
                A, B, C = sizes
                out3 = _launch3d(full.reshape(A, B, C), small_c.reshape(A, 1, C),
                                 out_dtype, op, y_is_first)
                return out3.reshape(out_shape)

    # General path: same shapes, or an irregular broadcast pattern.
    # broadcast_to is a no-op when shapes already match (the common case here).
    # TODO(synk): deeply alternating broadcast patterns (e.g. (A,1,C,1) vs
    # (A,B,C,D)) and two-small-operand outer products still materialize a
    # full-size copy in HBM; extend the in-kernel paths if such shapes matter.
    xf = jnp.broadcast_to(a, out_shape)
    yf = jnp.broadcast_to(b, out_shape)
    R, C = _factor_2d(out_shape)
    out2 = _launch2d(xf.reshape(R, C), yf.reshape(R, C), out_dtype, op,
                     y_is_first=False)
    return out2.reshape(out_shape)


class OnnxBinaryMathOperation:
    """JAX/Pallas equivalent of onnx2torch's OnnxBinaryMathOperation."""

    def __init__(self, math_op_function, broadcast: Optional[int] = None,
                 axis: Optional[int] = None):
        self.math_op_function = math_op_function
        self.broadcast = broadcast
        self.axis = axis

    def __call__(self, first, second):
        first = jnp.asarray(first)
        second = jnp.asarray(second)
        if self.broadcast == 1 and self.axis is not None:
            second = old_style_broadcast(first, second, self.axis)
        return _binary_op_pallas(first, second, self.math_op_function)


if __name__ == "__main__":
    key = jax.random.PRNGKey(0)
    k1, k2, k3, k4, k5, k6 = jax.random.split(key, 6)

    # 1) NCHW input + per-channel bias, ONNX old-style broadcast at axis=1
    #    (trailing-broadcast "column" path).
    first = jax.random.normal(k1, (2, 4, 16, 16), dtype=jnp.float32)
    per_channel = jax.random.normal(k2, (4,), dtype=jnp.float32)
    add_mod = OnnxBinaryMathOperation(jnp.add, broadcast=1, axis=1)
    out = jax.block_until_ready(add_mod(first, per_channel))
    ref = first + old_style_broadcast(first, per_channel, 1)
    assert out.shape == ref.shape and out.dtype == ref.dtype
    assert jnp.allclose(out, ref, atol=1e-6, rtol=1e-6)

    # 2) Same-shape multiply (general lane-dense slab path).
    mul_mod = OnnxBinaryMathOperation(jnp.multiply)
    out2 = jax.block_until_ready(mul_mod(first, first))
    assert jnp.allclose(out2, first * first, atol=1e-6, rtol=1e-6)

    # 3) Scalar `first` with non-commutative subtract (SMEM scalar path,
    #    argument order preserved).
    scalar = jnp.float32(3.5)
    sub_mod = OnnxBinaryMathOperation(jnp.subtract)
    out3 = jax.block_until_ready(sub_mod(scalar, first))
    assert jnp.allclose(out3, scalar - first, atol=1e-6, rtol=1e-6)

    # 4) Trailing-dim divisor ("bias row" path).
    x = jax.random.uniform(k3, (2, 8, 128), dtype=jnp.float32, minval=0.5, maxval=1.5)
    d = jax.random.uniform(k4, (128,), dtype=jnp.float32, minval=0.5, maxval=1.5)
    div_mod = OnnxBinaryMathOperation(jnp.true_divide)
    out4 = jax.block_until_ready(div_mod(x, d))
    assert jnp.allclose(out4, x / d, atol=1e-6, rtol=1e-6)

    # 5) Integer divide: result dtype comes from the op, not the inputs.
    xi = jnp.arange(1, 1 + 8 * 128, dtype=jnp.int32).reshape(8, 128)
    yi = jnp.full((8, 128), 4, dtype=jnp.int32)
    outi = jax.block_until_ready(div_mod(xi, yi))
    assert outi.dtype == jnp.float32
    assert jnp.allclose(outi, xi.astype(jnp.float32) / 4.0, atol=1e-6, rtol=1e-6)

    # 6) Middle-dim broadcast (B,1,D) vs (B,S,D) (3D in-kernel broadcast path).
    xm = jax.random.normal(k5, (2, 8, 256), dtype=jnp.float32)
    ym = jax.random.normal(k6, (2, 1, 256), dtype=jnp.float32)
    out6 = jax.block_until_ready(add_mod.__class__(jnp.add)(xm, ym))
    assert jnp.allclose(out6, xm + ym, atol=1e-6, rtol=1e-6)

    # 7) Misaligned total (no pad / no post-slice path).
    xo = jax.random.normal(jax.random.PRNGKey(7), (3, 5, 7), dtype=jnp.float32)
    out7 = jax.block_until_ready(OnnxBinaryMathOperation(jnp.add)(xo, xo))
    assert jnp.allclose(out7, xo + xo, atol=1e-6, rtol=1e-6)

    print("KERNEL_OK")
</pallas_src>

<mosaic_0001>
module attributes {stable_mosaic.version = 11 : i64} {
  func.func @_binop_kernel(%arg0: i32, %arg1: i32, %arg2: memref<8x256xf32, #tpu.memory_space<vmem>>, %arg3: memref<8x1xf32, #tpu.memory_space<vmem>>, %arg4: memref<8x256xf32, #tpu.memory_space<vmem>>) attributes {dimension_semantics = [#tpu.dimension_semantics<parallel>, #tpu.dimension_semantics<parallel>], iteration_bounds = array<i64: 1, 1>, scalar_prefetch = 0 : i64, scratch_operands = 0 : i64, tpu.core_type = #tpu.core_type<tc>, window_params = [{transform_indices = @transform_0, window_bounds = array<i64: 8, 256>}, {transform_indices = @transform_1, window_bounds = array<i64: 8, 1>}, {transform_indices = @transform_2, window_bounds = array<i64: 8, 256>}]} {
    %c0 = arith.constant 0 : index
    %c0_0 = arith.constant 0 : index
    %0 = vector.load %arg2[%c0, %c0_0] : memref<8x256xf32, #tpu.memory_space<vmem>>, vector<8x256xf32>
    %c0_1 = arith.constant 0 : index
    %c0_2 = arith.constant 0 : index
    %1 = vector.load %arg3[%c0_1, %c0_2] : memref<8x1xf32, #tpu.memory_space<vmem>>, vector<8x1xf32>
    %2 = vector.broadcast %1 : vector<8x1xf32> to vector<8x256xf32>
    %3 = arith.addf %0, %2 : vector<8x256xf32>
    %c0_3 = arith.constant 0 : index
    %c0_4 = arith.constant 0 : index
    %4 = vector.load %arg4[%c0_3, %c0_4] : memref<8x256xf32, #tpu.memory_space<vmem>>, vector<8x256xf32>
    tpu.vector_store %arg4[%c0_3, %c0_4], %3 {strides = array<i32>} : memref<8x256xf32, #tpu.memory_space<vmem>>, vector<8x256xf32>,
    return
  }
  func.func @transform_0(%arg0: i32, %arg1: i32) -> (i32, i32) {
    %c0_i32 = arith.constant 0 : i32
    return %arg0, %arg1 : i32, i32
  }
  func.func @transform_1(%arg0: i32, %arg1: i32) -> (i32, i32) {
    %c0_i32 = arith.constant 0 : i32
    %c0_i32_0 = arith.constant 0 : i32
    return %arg0, %c0_i32 : i32, i32
  }
  func.func @transform_2(%arg0: i32, %arg1: i32) -> (i32, i32) {
    %c0_i32 = arith.constant 0 : i32
    return %arg0, %arg1 : i32, i32
  }
}

</mosaic_0001>

<llo_original>
// kernel: tpu_custom_call.1
$region0: #{tpu_custom_call.1}
  #allocation0 [shape = 'u32[]', space=smem, size = 0x4, offset = 0x4, fixed_abs, tag = 'smem constant byte address 0x4 - core index']
  #allocation1 [shape = 'u32[144,128]{1,0:T(1,128)}', space=vmem, size = 0x12000, scoped, tag = 'internal scratch']
  %s0 = inlined_call_operand.hbm [shape: f32[8,256], index: 0, kind: input, shape index: {}]
  %s1 = inlined_call_operand.vmem [shape: f32[8,1], index: 1, kind: input, shape index: {}]
  %s2 = inlined_call_operand.hbm [shape: f32[8,256], index: 2, kind: output, shape index: {}]
  %s3 = sld [smem:[#allocation0]]
  $region22: #{tpu_custom_call.1} parent=0
    _
  %s5 = ssub.s32 1, %s3
  %s6 = scalar_select 0, %s5, %s3
  $region1: #{tpu_custom_call.1} parent=0
    #allocation2 [shape = 'u8[8192]{0}', space=vmem, size = 0x2000, scoped, tag = 'input window, operand 0, single buffered']
    #allocation3 [shape = 's32[1]{0}', space=sflag, size = 0x4, scoped, tag = 'scoped memory for tpu_custom_call.1']
    #allocation4 [shape = 's32[1]{0}', space=sflag, size = 0x4, scoped, tag = 'scoped memory for tpu_custom_call.1']
    #allocation5 [shape = 'u8[8192]{0}', space=vmem, size = 0x2000, scoped, tag = 'output window, operand 0, single buffered']
    %7 = vsyncpa [#allocation3], 0
    %8 = vsyncpa [#allocation4], 0
    // Predicated region
    $region2: #{tpu_custom_call.1} parent=1 // pred_check
      _
    $region3: #{tpu_custom_call.1} parent=1 // pred_check_branch
      %10 = sbr.rel (0) target = $region5
    $region4: #{tpu_custom_call.1} parent=1 // pred_region
      %s12 = ssub.s32 256, 256
      %13 = vsyncadd [#allocation3], %s12
      %s15 = sshll.u32 [#allocation2], 4
      %s16 = int_to_ptr.vmem [resolvable:$true] %s15
      %18 = dma.hbm_to_vmem [thread:$0]  %s0, 256, %s16, [#allocation3]
    $region5: #{tpu_custom_call.1} parent=1 // pred_fallthru
      _
    // Predicated region
    $region6: #{tpu_custom_call.1} parent=1 // pred_check
      _
    $region7: #{tpu_custom_call.1} parent=1 // pred_check_branch
      %20 = sbr.rel (0) target = $region9
    $region8: #{tpu_custom_call.1} parent=1 // pred_region
      _
    $region9: #{tpu_custom_call.1} parent=1 // pred_fallthru
      _
    // Predicated region
    $region10: #{tpu_custom_call.1} parent=1 // pred_check
      _
    $region11: #{tpu_custom_call.1} parent=1 // pred_check_branch
      %22 = sbr.rel (0) target = $region13
    $region12: #{tpu_custom_call.1} parent=1 // pred_region
      %23 = dma.done [#allocation3], 256
    $region13: #{tpu_custom_call.1} parent=1 // pred_fallthru
      _
    %v24 = vld [vmem:[#allocation2] sm:$0xff]
    %v25 = vld [vmem:[#allocation2 + $0x8] sm:$0xff]
    %v26 = vld [vmem:[%s1] sm:$0xff]
    %28 = vset.pattern.permute.xlu0 0
    %29 = vperm.xlu0 %28, %v26
    %v30 = vpop.permute.xlu0 %29
    %v32 = vadd.f32 %v24, %v30
    %v33 = vadd.f32 %v25, %v30
    %34 = vst [vmem:[#allocation5] sm:$0xff] %v32
    %35 = vst [vmem:[#allocation5 + $0x8] sm:$0xff] %v33
    // Predicated region
    $region14: #{tpu_custom_call.1} parent=1 // pred_check
      _
    $region15: #{tpu_custom_call.1} parent=1 // pred_check_branch
      %37 = sbr.rel (0) target = $region17
    $region16: #{tpu_custom_call.1} parent=1 // pred_region
      %s39 = ssub.s32 256, 256
      %40 = vsyncadd [#allocation4], %s39
      %s42 = sshll.u32 [#allocation5], 4
      %s43 = int_to_ptr.vmem [resolvable:$true] %s42
      %45 = dma.vmem_to_hbm [thread:$0]  %s43, 256, %s2, [#allocation4]
    $region17: #{tpu_custom_call.1} parent=1 // pred_fallthru
      _
    // Predicated region
    $region18: #{tpu_custom_call.1} parent=1 // pred_check
      _
    $region19: #{tpu_custom_call.1} parent=1 // pred_check_branch
      %47 = sbr.rel (0) target = $region21
    $region20: #{tpu_custom_call.1} parent=1 // pred_region
      %48 = dma.done [#allocation4], 256
    $region21: #{tpu_custom_call.1} parent=1 // pred_fallthru
      _
    %49 = vsyncpa [#allocation3], 1
    %50 = vsyncpa [#allocation4], 1

</llo_original>
